<compile_context>
chip_gen: v5e
topology: v5e:2x2
jax: 0.10.0
libtpu: 0.0.40
codegen_flags: <defaults>
</compile_context>

<pallas_src>
import jax
import jax.numpy as jnp
import numpy as np
from jax.experimental import pallas as pl
from jax.experimental.pallas import tpu as pltpu


# ----------------------------------------------------------------------------
# Single fused kernel: entire ResNetBlock forward.
# All operands are small enough to live whole in VMEM (B<=8, dims<=128).
# ----------------------------------------------------------------------------
def _resnet_block_kernel(x_ref, w_in_ref, b_in_ref, w0_ref, b0_ref,
                         w1_ref, b1_ref, w_out_ref, b_out_ref, o_ref):
    # in_layers: Linear(in_size -> res_size) + ReLU
    h0 = jnp.maximum(
        jnp.dot(x_ref[...], w_in_ref[...], preferred_element_type=jnp.float32)
        + b_in_ref[...], 0.0)
    # layers[0:-2]: Linear + ReLU + Linear + ReLU
    h1 = jnp.maximum(
        jnp.dot(h0, w0_ref[...], preferred_element_type=jnp.float32)
        + b0_ref[...], 0.0)
    h2 = jnp.maximum(
        jnp.dot(h1, w1_ref[...], preferred_element_type=jnp.float32)
        + b1_ref[...], 0.0)
    # layers[-1] (ReLU) applied to the residual sum; layers[-2] is skipped by forward()
    h3 = jnp.maximum(h2 + h0, 0.0)
    # out_layers: Linear(res_size -> out_size) + ReLU
    o_ref[...] = jnp.maximum(
        jnp.dot(h3, w_out_ref[...], preferred_element_type=jnp.float32)
        + b_out_ref[...], 0.0)


def resnet_block_forward(x, p):
    B = x.shape[0]
    out_size = p["w_out"].shape[1]
    vmem = pl.BlockSpec(memory_space=pltpu.MemorySpace.VMEM)
    return pl.pallas_call(
        _resnet_block_kernel,
        out_shape=jax.ShapeDtypeStruct((B, out_size), jnp.float32),
        in_specs=[vmem] * 9,
        out_specs=vmem,
    )(x, p["w_in"], p["b_in"], p["w0"], p["b0"],
      p["w1"], p["b1"], p["w_out"], p["b_out"])


# ----------------------------------------------------------------------------
# Pure-JAX reference (for correctness checking)
# ----------------------------------------------------------------------------
def reference_forward(x, p):
    hp = jax.lax.Precision.HIGHEST
    h0 = jnp.maximum(jnp.dot(x, p["w_in"], precision=hp) + p["b_in"], 0.0)
    h1 = jnp.maximum(jnp.dot(h0, p["w0"], precision=hp) + p["b0"], 0.0)
    h2 = jnp.maximum(jnp.dot(h1, p["w1"], precision=hp) + p["b1"], 0.0)
    h3 = jnp.maximum(h2 + h0, 0.0)
    return jnp.maximum(jnp.dot(h3, p["w_out"], precision=hp) + p["b_out"], 0.0)


if __name__ == "__main__":
    key = jax.random.PRNGKey(0)
    k = jax.random.split(key, 12)

    # ResNetBlock(in_size=32, out_size=64, res_size=128, layers=3,
    #             activation='ReLU', batchnorm=None), batch of 8.
    B, in_size, res_size, out_size = 8, 32, 128, 64

    def init_w(kk, shape, fan_in):
        return (jax.random.normal(kk, shape, jnp.float32) / np.sqrt(fan_in)).astype(jnp.float32)

    def init_b(kk, n):
        # biases stored as (1, n) so they broadcast directly in-kernel (no wrapper reshape)
        return (0.01 * jax.random.normal(kk, (1, n), jnp.float32)).astype(jnp.float32)

    params = {
        "w_in": init_w(k[0], (in_size, res_size), in_size),
        "b_in": init_b(k[1], res_size),
        "w0":   init_w(k[2], (res_size, res_size), res_size),
        "b0":   init_b(k[3], res_size),
        "w1":   init_w(k[4], (res_size, res_size), res_size),
        "b1":   init_b(k[5], res_size),
        # The third residual Linear (layers[-2]) exists in the module but the
        # PyTorch forward() never applies it, so it is intentionally unused here.
        "w2_unused": init_w(k[6], (res_size, res_size), res_size),
        "b2_unused": init_b(k[7], res_size),
        "w_out": init_w(k[8], (res_size, out_size), res_size),
        "b_out": init_b(k[9], out_size),
    }

    x = jax.random.normal(k[10], (B, in_size), jnp.float32)

    out = resnet_block_forward(x, params)
    out = jax.block_until_ready(out)

    assert out.shape == (B, out_size), out.shape
    assert out.dtype == jnp.float32, out.dtype

    ref = reference_forward(x, params)
    np.testing.assert_allclose(np.asarray(out), np.asarray(ref), atol=2e-3, rtol=2e-3)

    print("KERNEL_OK")
</pallas_src>

<mosaic_0001>
module attributes {stable_mosaic.version = 11 : i64} {
  func.func @_resnet_block_kernel(%arg0: memref<8x32xf32, #tpu.memory_space<vmem>>, %arg1: memref<32x128xf32, #tpu.memory_space<vmem>>, %arg2: memref<1x128xf32, #tpu.memory_space<vmem>>, %arg3: memref<128x128xf32, #tpu.memory_space<vmem>>, %arg4: memref<1x128xf32, #tpu.memory_space<vmem>>, %arg5: memref<128x128xf32, #tpu.memory_space<vmem>>, %arg6: memref<1x128xf32, #tpu.memory_space<vmem>>, %arg7: memref<128x64xf32, #tpu.memory_space<vmem>>, %arg8: memref<1x64xf32, #tpu.memory_space<vmem>>, %arg9: memref<8x64xf32, #tpu.memory_space<vmem>>) attributes {dimension_semantics = [], scalar_prefetch = 0 : i64, scratch_operands = 0 : i64, tpu.core_type = #tpu.core_type<tc>} {
    %c0 = arith.constant 0 : index
    %c0_0 = arith.constant 0 : index
    %0 = vector.load %arg0[%c0, %c0_0] : memref<8x32xf32, #tpu.memory_space<vmem>>, vector<8x32xf32>
    %c0_1 = arith.constant 0 : index
    %c0_2 = arith.constant 0 : index
    %1 = vector.load %arg1[%c0_1, %c0_2] : memref<32x128xf32, #tpu.memory_space<vmem>>, vector<32x128xf32>
    %cst = arith.constant dense<0.000000e+00> : vector<8x128xf32>
    %2 = tpu.matmul %0, %1, %cst {dimension_numbers = #tpu.dot_dimension_numbers<[1], [0], [0], [1], [0, 0, 1, 1], [], []>} : vector<8x32xf32>, vector<32x128xf32>, vector<8x128xf32> -> vector<8x128xf32>
    %c0_3 = arith.constant 0 : index
    %c0_4 = arith.constant 0 : index
    %3 = vector.load %arg2[%c0_3, %c0_4] : memref<1x128xf32, #tpu.memory_space<vmem>>, vector<1x128xf32>
    %4 = vector.broadcast %3 : vector<1x128xf32> to vector<8x128xf32>
    %5 = arith.addf %2, %4 : vector<8x128xf32>
    %cst_5 = arith.constant 0.000000e+00 : f32
    %6 = vector.broadcast %cst_5 : f32 to vector<8x128xf32>
    %7 = arith.maximumf %5, %6 : vector<8x128xf32>
    %c0_6 = arith.constant 0 : index
    %c0_7 = arith.constant 0 : index
    %8 = vector.load %arg3[%c0_6, %c0_7] : memref<128x128xf32, #tpu.memory_space<vmem>>, vector<128x128xf32>
    %cst_8 = arith.constant dense<0.000000e+00> : vector<8x128xf32>
    %9 = tpu.matmul %7, %8, %cst_8 {dimension_numbers = #tpu.dot_dimension_numbers<[1], [0], [0], [1], [0, 0, 1, 1], [], []>} : vector<8x128xf32>, vector<128x128xf32>, vector<8x128xf32> -> vector<8x128xf32>
    %c0_9 = arith.constant 0 : index
    %c0_10 = arith.constant 0 : index
    %10 = vector.load %arg4[%c0_9, %c0_10] : memref<1x128xf32, #tpu.memory_space<vmem>>, vector<1x128xf32>
    %11 = vector.broadcast %10 : vector<1x128xf32> to vector<8x128xf32>
    %12 = arith.addf %9, %11 : vector<8x128xf32>
    %cst_11 = arith.constant 0.000000e+00 : f32
    %13 = vector.broadcast %cst_11 : f32 to vector<8x128xf32>
    %14 = arith.maximumf %12, %13 : vector<8x128xf32>
    %c0_12 = arith.constant 0 : index
    %c0_13 = arith.constant 0 : index
    %15 = vector.load %arg5[%c0_12, %c0_13] : memref<128x128xf32, #tpu.memory_space<vmem>>, vector<128x128xf32>
    %cst_14 = arith.constant dense<0.000000e+00> : vector<8x128xf32>
    %16 = tpu.matmul %14, %15, %cst_14 {dimension_numbers = #tpu.dot_dimension_numbers<[1], [0], [0], [1], [0, 0, 1, 1], [], []>} : vector<8x128xf32>, vector<128x128xf32>, vector<8x128xf32> -> vector<8x128xf32>
    %c0_15 = arith.constant 0 : index
    %c0_16 = arith.constant 0 : index
    %17 = vector.load %arg6[%c0_15, %c0_16] : memref<1x128xf32, #tpu.memory_space<vmem>>, vector<1x128xf32>
    %18 = vector.broadcast %17 : vector<1x128xf32> to vector<8x128xf32>
    %19 = arith.addf %16, %18 : vector<8x128xf32>
    %cst_17 = arith.constant 0.000000e+00 : f32
    %20 = vector.broadcast %cst_17 : f32 to vector<8x128xf32>
    %21 = arith.maximumf %19, %20 : vector<8x128xf32>
    %22 = arith.addf %21, %7 : vector<8x128xf32>
    %cst_18 = arith.constant 0.000000e+00 : f32
    %23 = vector.broadcast %cst_18 : f32 to vector<8x128xf32>
    %24 = arith.maximumf %22, %23 : vector<8x128xf32>
    %c0_19 = arith.constant 0 : index
    %c0_20 = arith.constant 0 : index
    %25 = vector.load %arg7[%c0_19, %c0_20] : memref<128x64xf32, #tpu.memory_space<vmem>>, vector<128x64xf32>
    %cst_21 = arith.constant dense<0.000000e+00> : vector<8x64xf32>
    %26 = tpu.matmul %24, %25, %cst_21 {dimension_numbers = #tpu.dot_dimension_numbers<[1], [0], [0], [1], [0, 0, 1, 1], [], []>} : vector<8x128xf32>, vector<128x64xf32>, vector<8x64xf32> -> vector<8x64xf32>
    %c0_22 = arith.constant 0 : index
    %c0_23 = arith.constant 0 : index
    %27 = vector.load %arg8[%c0_22, %c0_23] : memref<1x64xf32, #tpu.memory_space<vmem>>, vector<1x64xf32>
    %28 = vector.broadcast %27 : vector<1x64xf32> to vector<8x64xf32>
    %29 = arith.addf %26, %28 : vector<8x64xf32>
    %cst_24 = arith.constant 0.000000e+00 : f32
    %30 = vector.broadcast %cst_24 : f32 to vector<8x64xf32>
    %31 = arith.maximumf %29, %30 : vector<8x64xf32>
    %c0_25 = arith.constant 0 : index
    %c0_26 = arith.constant 0 : index
    %32 = vector.load %arg9[%c0_25, %c0_26] : memref<8x64xf32, #tpu.memory_space<vmem>>, vector<8x64xf32>
    tpu.vector_store %arg9[%c0_25, %c0_26], %31 {strides = array<i32>} : memref<8x64xf32, #tpu.memory_space<vmem>>, vector<8x64xf32>,
    return
  }
}

</mosaic_0001>

<llo_original>
// kernel: tpu_custom_call.1
$region0: #{tpu_custom_call.1}
  #allocation0 [shape = 'u32[]', space=smem, size = 0x4, offset = 0x4, fixed_abs, tag = 'smem constant byte address 0x4 - core index']
  #allocation1 [shape = 'u32[72,128]{1,0:T(1,128)}', space=vmem, size = 0x9000, scoped, tag = 'internal scratch']
  %s0 = inlined_call_operand.vmem [shape: f32[8,32], index: 0, kind: input, shape index: {}]
  %s1 = inlined_call_operand.vmem [shape: f32[32,128], index: 1, kind: input, shape index: {}]
  %s2 = inlined_call_operand.vmem [shape: f32[1,128], index: 2, kind: input, shape index: {}]
  %s3 = inlined_call_operand.vmem [shape: f32[128,128], index: 3, kind: input, shape index: {}]
  %s4 = inlined_call_operand.vmem [shape: f32[1,128], index: 4, kind: input, shape index: {}]
  %s5 = inlined_call_operand.hbm [shape: f32[128,128], index: 5, kind: input, shape index: {}]
  %s6 = inlined_call_operand.vmem [shape: f32[1,128], index: 6, kind: input, shape index: {}]
  %s7 = inlined_call_operand.vmem [shape: f32[128,64], index: 7, kind: input, shape index: {}]
  %s8 = inlined_call_operand.vmem [shape: f32[1,64], index: 8, kind: input, shape index: {}]
  %s9 = inlined_call_operand.hbm [shape: f32[8,64], index: 9, kind: output, shape index: {}]
  %s10 = sld [smem:[#allocation0]]
  $region50: #{tpu_custom_call.1} parent=0
    _
  %s12 = ssub.s32 1, %s10
  %s13 = scalar_select 0, %s12, %s10
  $region1: #{tpu_custom_call.1} parent=0
    #allocation2 [shape = 'u8[65536]{0}', space=vmem, size = 0x10000, scoped, tag = 'input window, operand 5, single buffered']
    #allocation3 [shape = 's32[1]{0}', space=sflag, size = 0x4, scoped, tag = 'scoped memory for tpu_custom_call.1']
    #allocation4 [shape = 's32[1]{0}', space=sflag, size = 0x4, scoped, tag = 'scoped memory for tpu_custom_call.1']
    #allocation5 [shape = 'u8[4096]{0}', space=vmem, size = 0x1000, scoped, tag = 'output window, operand 0, single buffered']
    %14 = vsyncpa [#allocation3], 0
    %15 = vsyncpa [#allocation4], 0
    // Predicated region
    $region2: #{tpu_custom_call.1} parent=1 // pred_check
      _
    $region3: #{tpu_custom_call.1} parent=1 // pred_check_branch
      %17 = sbr.rel (0) target = $region5
    $region4: #{tpu_custom_call.1} parent=1 // pred_region
      _
    $region5: #{tpu_custom_call.1} parent=1 // pred_fallthru
      _
    // Predicated region
    $region6: #{tpu_custom_call.1} parent=1 // pred_check
      _
    $region7: #{tpu_custom_call.1} parent=1 // pred_check_branch
      %19 = sbr.rel (0) target = $region9
    $region8: #{tpu_custom_call.1} parent=1 // pred_region
      _
    $region9: #{tpu_custom_call.1} parent=1 // pred_fallthru
      _
    // Predicated region
    $region10: #{tpu_custom_call.1} parent=1 // pred_check
      _
    $region11: #{tpu_custom_call.1} parent=1 // pred_check_branch
      %21 = sbr.rel (0) target = $region13
    $region12: #{tpu_custom_call.1} parent=1 // pred_region
      _
    $region13: #{tpu_custom_call.1} parent=1 // pred_fallthru
      _
    // Predicated region
    $region14: #{tpu_custom_call.1} parent=1 // pred_check
      _
    $region15: #{tpu_custom_call.1} parent=1 // pred_check_branch
      %23 = sbr.rel (0) target = $region17
    $region16: #{tpu_custom_call.1} parent=1 // pred_region
      _
    $region17: #{tpu_custom_call.1} parent=1 // pred_fallthru
      _
    // Predicated region
    $region18: #{tpu_custom_call.1} parent=1 // pred_check
      _
    $region19: #{tpu_custom_call.1} parent=1 // pred_check_branch
      %25 = sbr.rel (0) target = $region21
    $region20: #{tpu_custom_call.1} parent=1 // pred_region
      _
    $region21: #{tpu_custom_call.1} parent=1 // pred_fallthru
      _
    // Predicated region
    $region22: #{tpu_custom_call.1} parent=1 // pred_check
      _
    $region23: #{tpu_custom_call.1} parent=1 // pred_check_branch
      %27 = sbr.rel (0) target = $region25
    $region24: #{tpu_custom_call.1} parent=1 // pred_region
      %29 = vsyncadd [#allocation3], 0
      %s30 = sshll.u32 %s5, 4
      %s31 = int_to_ptr.hbm [resolvable:$true] %s30
      %s32 = sshll.u32 [#allocation2], 4
      %s33 = int_to_ptr.vmem [resolvable:$true] %s32
      %38 = dma.hbm_to_vmem [thread:$0]  %s31, 2048, %s33, [#allocation3], 128, 128, 8
    $region25: #{tpu_custom_call.1} parent=1 // pred_fallthru
      _
    // Predicated region
    $region26: #{tpu_custom_call.1} parent=1 // pred_check
      _
    $region27: #{tpu_custom_call.1} parent=1 // pred_check_branch
      %40 = sbr.rel (0) target = $region29
    $region28: #{tpu_custom_call.1} parent=1 // pred_region
      _
    $region29: #{tpu_custom_call.1} parent=1 // pred_fallthru
      _
    // Predicated region
    $region30: #{tpu_custom_call.1} parent=1 // pred_check
      _
    $region31: #{tpu_custom_call.1} parent=1 // pred_check_branch
      %42 = sbr.rel (0) target = $region33
    $region32: #{tpu_custom_call.1} parent=1 // pred_region
      _
    $region33: #{tpu_custom_call.1} parent=1 // pred_fallthru
      _
    // Predicated region
    $region34: #{tpu_custom_call.1} parent=1 // pred_check
      _
    $region35: #{tpu_custom_call.1} parent=1 // pred_check_branch
      %44 = sbr.rel (0) target = $region37
    $region36: #{tpu_custom_call.1} parent=1 // pred_region
      _
    $region37: #{tpu_custom_call.1} parent=1 // pred_fallthru
      _
    // Predicated region
    $region38: #{tpu_custom_call.1} parent=1 // pred_check
      _
    $region39: #{tpu_custom_call.1} parent=1 // pred_check_branch
      %46 = sbr.rel (0) target = $region41
    $region40: #{tpu_custom_call.1} parent=1 // pred_region
      %48 = dma.done [#allocation3], 2048
    $region41: #{tpu_custom_call.1} parent=1 // pred_fallthru
      _
    %v49 = vld [vmem:[%s0] sm:$0xff]
    %v50 = vld [vmem:[%s1] sm:$0xff]
    %v51 = vld [vmem:[%s1 + $0x8] sm:$0xff]
    %v52 = vld [vmem:[%s1 + $0x10] sm:$0xff]
    %v53 = vld [vmem:[%s1 + $0x18] sm:$0xff]
    %v54 = vld [vmem:[%s2] sm:$0x1]
    %v56 = vperm.slane %v54, 0
    %vm58 = vcmask 261120
    %v60 = vsel %vm58, %v49, 0
    %62 = vmatpush.msra.mxu0 0.0
    %63 = vmatpush.msra.mxu0 0.0
    %64 = vmatpush.msra.mxu0 0.0
    %65 = vmatpush.msra.mxu0 0.0
    %66 = vmatpush.msra.mxu0 0.0
    %67 = vmatpush.msra.mxu0 0.0
    %68 = vmatpush.msra.mxu0 0.0
    %69 = vmatpush.msra.mxu0 0.0
    %70 = vmatpush.msra.mxu0 0.0
    %71 = vmatpush.msra.mxu0 0.0
    %72 = vmatpush.msra.mxu0 0.0
    %73 = vmatpush.msra.mxu0 0.0
    %74 = vmatpush.msra.mxu0 %v53
    %75 = vmatpush.msra.mxu0 %v52
    %76 = vmatpush.msra.mxu0 %v51
    %77 = vmatpush.msra.mxu0 %v50
    %78 = vmatmul.f32.gmra.mxu0 %v60
    %v79 = vpop.f32.mrf.mxu0
    %v80 = vadd.f32 %v56, %v79
    %81 = vdwg.mxu0
    %v82 = vmax.f32 %v80, 0.0
    %v83 = vld [vmem:[%s3] sm:$0xff]
    %v84 = vld [vmem:[%s3 + $0x8] sm:$0xff]
    %v85 = vld [vmem:[%s3 + $0x10] sm:$0xff]
    %v86 = vld [vmem:[%s3 + $0x18] sm:$0xff]
    %v87 = vld [vmem:[%s3 + $0x20] sm:$0xff]
    %v88 = vld [vmem:[%s3 + $0x28] sm:$0xff]
    %v89 = vld [vmem:[%s3 + $0x30] sm:$0xff]
    %v90 = vld [vmem:[%s3 + $0x38] sm:$0xff]
    %v91 = vld [vmem:[%s3 + $0x40] sm:$0xff]
    %v92 = vld [vmem:[%s3 + $0x48] sm:$0xff]
    %v93 = vld [vmem:[%s3 + $0x50] sm:$0xff]
    %v94 = vld [vmem:[%s3 + $0x58] sm:$0xff]
    %v95 = vld [vmem:[%s3 + $0x60] sm:$0xff]
    %v96 = vld [vmem:[%s3 + $0x68] sm:$0xff]
    %v97 = vld [vmem:[%s3 + $0x70] sm:$0xff]
    %v98 = vld [vmem:[%s3 + $0x78] sm:$0xff]
    %v99 = vld [vmem:[%s4] sm:$0x1]
    %v101 = vperm.slane %v99, 0
    %103 = vmatpush.msra.mxu0 %v98
    %104 = vmatpush.msra.mxu0 %v97
    %105 = vmatpush.msra.mxu0 %v96
    %106 = vmatpush.msra.mxu0 %v95
    %107 = vmatpush.msra.mxu0 %v94
    %108 = vmatpush.msra.mxu0 %v93
    %109 = vmatpush.msra.mxu0 %v92
    %110 = vmatpush.msra.mxu0 %v91
    %111 = vmatpush.msra.mxu0 %v90
    %112 = vmatpush.msra.mxu0 %v89
    %113 = vmatpush.msra.mxu0 %v88
    %114 = vmatpush.msra.mxu0 %v87
    %115 = vmatpush.msra.mxu0 %v86
    %116 = vmatpush.msra.mxu0 %v85
    %117 = vmatpush.msra.mxu0 %v84
    %118 = vmatpush.msra.mxu0 %v83
    %119 = vmatmul.f32.gmra.mxu0 %v82
    %v120 = vpop.f32.mrf.mxu0
    %v121 = vadd.f32 %v101, %v120
    %122 = vdwg.mxu0
    %v123 = vmax.f32 %v121, 0.0
    %v124 = vld [vmem:[#allocation2] sm:$0xff]
    %v125 = vld [vmem:[#allocation2 + $0x8] sm:$0xff]
    %v126 = vld [vmem:[#allocation2 + $0x10] sm:$0xff]
    %v127 = vld [vmem:[#allocation2 + $0x18] sm:$0xff]
    %v128 = vld [vmem:[#allocation2 + $0x20] sm:$0xff]
    %v129 = vld [vmem:[#allocation2 + $0x28] sm:$0xff]
    %v130 = vld [vmem:[#allocation2 + $0x30] sm:$0xff]
    %v131 = vld [vmem:[#allocation2 + $0x38] sm:$0xff]
    %v132 = vld [vmem:[#allocation2 + $0x40] sm:$0xff]
    %v133 = vld [vmem:[#allocation2 + $0x48] sm:$0xff]
    %v134 = vld [vmem:[#allocation2 + $0x50] sm:$0xff]
    %v135 = vld [vmem:[#allocation2 + $0x58] sm:$0xff]
    %v136 = vld [vmem:[#allocation2 + $0x60] sm:$0xff]
    %v137 = vld [vmem:[#allocation2 + $0x68] sm:$0xff]
    %v138 = vld [vmem:[#allocation2 + $0x70] sm:$0xff]
    %v139 = vld [vmem:[#allocation2 + $0x78] sm:$0xff]
    %v140 = vld [vmem:[%s6] sm:$0x1]
    %v142 = vperm.slane %v140, 0
    %144 = vmatpush.msra.mxu0 %v139
    %145 = vmatpush.msra.mxu0 %v138
    %146 = vmatpush.msra.mxu0 %v137
    %147 = vmatpush.msra.mxu0 %v136
    %148 = vmatpush.msra.mxu0 %v135
    %149 = vmatpush.msra.mxu0 %v134
    %150 = vmatpush.msra.mxu0 %v133
    %151 = vmatpush.msra.mxu0 %v132
    %152 = vmatpush.msra.mxu0 %v131
    %153 = vmatpush.msra.mxu0 %v130
    %154 = vmatpush.msra.mxu0 %v129
    %155 = vmatpush.msra.mxu0 %v128
    %156 = vmatpush.msra.mxu0 %v127
    %157 = vmatpush.msra.mxu0 %v126
    %158 = vmatpush.msra.mxu0 %v125
    %159 = vmatpush.msra.mxu0 %v124
    %160 = vmatmul.f32.gmra.mxu0 %v123
    %v161 = vpop.f32.mrf.mxu0
    %v162 = vadd.f32 %v142, %v161
    %163 = vdwg.mxu0
    %v164 = vmax.f32 %v162, 0.0
    %v165 = vadd.f32 %v164, %v82
    %v166 = vmax.f32 %v165, 0.0
    %v167 = vld [vmem:[%s7] sm:$0xff]
    %v168 = vld [vmem:[%s7 + $0x8] sm:$0xff]
    %v169 = vld [vmem:[%s7 + $0x10] sm:$0xff]
    %v170 = vld [vmem:[%s7 + $0x18] sm:$0xff]
    %v171 = vld [vmem:[%s7 + $0x20] sm:$0xff]
    %v172 = vld [vmem:[%s7 + $0x28] sm:$0xff]
    %v173 = vld [vmem:[%s7 + $0x30] sm:$0xff]
    %v174 = vld [vmem:[%s7 + $0x38] sm:$0xff]
    %v175 = vld [vmem:[%s7 + $0x40] sm:$0xff]
    %v176 = vld [vmem:[%s7 + $0x48] sm:$0xff]
    %v177 = vld [vmem:[%s7 + $0x50] sm:$0xff]
    %v178 = vld [vmem:[%s7 + $0x58] sm:$0xff]
    %v179 = vld [vmem:[%s7 + $0x60] sm:$0xff]
    %v180 = vld [vmem:[%s7 + $0x68] sm:$0xff]
    %v181 = vld [vmem:[%s7 + $0x70] sm:$0xff]
    %v182 = vld [vmem:[%s7 + $0x78] sm:$0xff]
    %v183 = vld [vmem:[%s8] sm:$0x1]
    %v185 = vperm.slane %v183, 0
    %187 = vmatpush.msra.mxu0 %v182
    %188 = vmatpush.msra.mxu0 %v181
    %189 = vmatpush.msra.mxu0 %v180
    %190 = vmatpush.msra.mxu0 %v179
    %191 = vmatpush.msra.mxu0 %v178
    %192 = vmatpush.msra.mxu0 %v177
    %193 = vmatpush.msra.mxu0 %v176
    %194 = vmatpush.msra.mxu0 %v175
    %195 = vmatpush.msra.mxu0 %v174
    %196 = vmatpush.msra.mxu0 %v173
    %197 = vmatpush.msra.mxu0 %v172
    %198 = vmatpush.msra.mxu0 %v171
    %199 = vmatpush.msra.mxu0 %v170
    %200 = vmatpush.msra.mxu0 %v169
    %201 = vmatpush.msra.mxu0 %v168
    %202 = vmatpush.msra.mxu0 %v167
    %203 = vmatmul.f32.gmra.mxu0 %v166
    %v204 = vpop.f32.mrf.mxu0
    %v205 = vadd.f32 %v185, %v204
    %206 = vdwg.mxu0
    %v207 = vmax.f32 %v205, 0.0
    %vm208 = vcmask 523264
    %209 = vst.msk [vmem:[#allocation5] sm:$0xff] %vm208, %v207
    // Predicated region
    $region42: #{tpu_custom_call.1} parent=1 // pred_check
      _
    $region43: #{tpu_custom_call.1} parent=1 // pred_check_branch
      %211 = sbr.rel (0) target = $region45
    $region44: #{tpu_custom_call.1} parent=1 // pred_region
      %213 = vsyncadd [#allocation4], 0
      %s215 = sshll.u32 [#allocation5], 4
      %s216 = int_to_ptr.vmem [resolvable:$true] %s215
      %s217 = sshll.u32 %s9, 4
      %s218 = int_to_ptr.hbm [resolvable:$true] %s217
      %220 = dma.vmem_to_hbm [thread:$0]  %s216, 128, %s218, [#allocation4]
    $region45: #{tpu_custom_call.1} parent=1 // pred_fallthru
      _
    // Predicated region
    $region46: #{tpu_custom_call.1} parent=1 // pred_check
      _
    $region47: #{tpu_custom_call.1} parent=1 // pred_check_branch
      %222 = sbr.rel (0) target = $region49
    $region48: #{tpu_custom_call.1} parent=1 // pred_region
      %224 = dma.done [#allocation4], 128
    $region49: #{tpu_custom_call.1} parent=1 // pred_fallthru
      _
    %225 = vsyncpa [#allocation3], 1
    %226 = vsyncpa [#allocation4], 1

</llo_original>
